<compile_context>
chip_gen: v5e
topology: v5e:2x2
jax: 0.10.0
libtpu: 0.0.40
codegen_flags: <defaults>
</compile_context>

<pallas_src>
import jax
import jax.numpy as jnp
from jax.experimental import pallas as pl
from jax.experimental.pallas import tpu as pltpu


_LANE = 128
_DEFAULT_TILE_BYTES = 4 << 20    # per-buffer state-tile target (f32 worst case)
_SMALL_BATCH_BYTES = 64 << 10    # below this, plain jnp beats a pallas dispatch
_MEGACORE_MIN_BYTES = 2 << 20    # payload above which >=2 grid steps pay off (v7x)


def _round_up(x, m):
    return (x + m - 1) // m * m


def _qvalue_kernel(x_ref, w_ref, b_ref, o_ref):
    """One batch tile: (tb, K) @ (K, pack) block-diagonal MXU matmul + bias.

    x_ref : (tb, K)    VMEM, native input dtype (cast to f32 in-kernel)
    w_ref : (K, pack)  VMEM, pinned folded block-diagonal weight (f32)
    b_ref : (1, 1)     SMEM, folded scalar bias
    o_ref : (tb, pack) VMEM, f32
    """
    x = x_ref[...].astype(jnp.float32)
    q = jnp.dot(x, w_ref[...], preferred_element_type=jnp.float32) + b_ref[0, 0]
    o_ref[...] = q.astype(o_ref.dtype)


def fold_params(params, *, lane_width=_LANE):
    """Fold the activation-free 4-layer chain into one affine map and pre-build
    a lane-dense block-diagonal weight when `obs` divides 128.

    Returns a dict with:
      w_col    : (obs, 1)   folded weight column (for the tiny-batch fallback)
      w_packed : (pack*obs, pack) block-diagonal weight (column k = w_col in
                 rows k*obs..(k+1)*obs), or w_col itself when pack == 1
      b        : (1, 1)     folded bias
      obs, pack
    """
    (w1, b1), (w2, b2), (w3, b3), (w4, b4) = params
    w_col = (w1 @ w2 @ w3 @ w4).astype(jnp.float32)                      # (obs, 1)
    b_eff = (((b1 @ w2 + b2) @ w3 + b3) @ w4 + b4).astype(jnp.float32)   # (1, 1)
    b_eff = b_eff.reshape(1, 1)
    obs = w_col.shape[0]

    if obs < lane_width and lane_width % obs == 0:
        pack = lane_width // obs                       # obs=32 -> pack=4
        # kron(I_pack, w_col) -> (pack*obs, pack) block-diagonal weight.
        w_packed = jnp.kron(jnp.eye(pack, dtype=jnp.float32), w_col)
    else:
        pack = 1
        w_packed = w_col

    return {"w_col": w_col, "w_packed": w_packed, "b": b_eff,
            "obs": obs, "pack": pack}


def qvalue_forward(state, folded, *, batch_tile=None):
    """Pallas forward pass. state: (B, obs), any float/int dtype.
    Returns (B, 1) float32 = state @ w_eff + b_eff."""
    obs = folded["obs"]
    pack = folded["pack"]
    b = folded["b"]
    B = state.shape[0]
    assert state.shape == (B, obs), state.shape

    # Tiny payloads (the module's own B=8, obs=32 case): the pallas dispatch +
    # DMA setup dominate; let XLA fuse the matvec into neighbouring ops.
    if B * obs * jnp.dtype(state.dtype).itemsize < _SMALL_BATCH_BYTES:
        return state.astype(jnp.float32) @ folded["w_col"] + b

    # Pack obs-wide rows into lane-dense 128-wide rows: (B, obs) -> (Bp, pack*obs).
    b_pad = _round_up(B, pack)
    if b_pad != B:
        state = jnp.pad(state, ((0, b_pad - B), (0, 0)))   # rare ragged-batch case
    bp = b_pad // pack
    k_dim = pack * obs
    x = state.reshape(bp, k_dim)                           # free, row-major contiguous

    # --- Tile selection (in packed rows) -----------------------------------
    # ~4 MiB of state per buffer: grid-step overhead becomes negligible while
    # the double-buffered input still fits every generation's default scoped
    # VMEM (16 MiB v5e, 32 MiB v6e/v7x).
    if batch_tile is None:
        tb = max(_LANE, _DEFAULT_TILE_BYTES // (k_dim * 4))
    else:
        tb = max(_LANE, batch_tile // pack)                # user tile is in original rows
    tb = _round_up(tb, _LANE)          # multiple of 128 -> satisfies (8,128) rules

    payload_bytes = bp * k_dim * jnp.dtype(state.dtype).itemsize
    if bp <= tb:
        if payload_bytes >= _MEGACORE_MIN_BYTES and bp >= 2 * _LANE:
            # Force >=2 grid steps so dimension_semantics=("parallel",) can
            # shard the batch across both v7x TensorCores (no-op on v5e/v6e).
            tb = _round_up(pl.cdiv(bp, 2), _LANE)
        else:
            tb = bp                    # single full-dim block
    grid = (pl.cdiv(bp, tb),)

    cost = pl.CostEstimate(
        flops=2 * bp * k_dim * pack,
        transcendentals=0,
        bytes_accessed=payload_bytes + k_dim * pack * 4 + bp * pack * 4 + 4,
    )

    out = pl.pallas_call(
        _qvalue_kernel,
        out_shape=jax.ShapeDtypeStruct((bp, pack), jnp.float32),
        grid=grid,
        in_specs=[
            pl.BlockSpec((tb, k_dim), lambda i: (i, 0)),            # streamed state tile
            pl.BlockSpec((k_dim, pack), lambda i: (0, 0)),          # pinned folded weight
            pl.BlockSpec(memory_space=pltpu.MemorySpace.SMEM),      # scalar bias
        ],
        out_specs=pl.BlockSpec((tb, pack), lambda i: (i, 0)),
        compiler_params=pltpu.CompilerParams(
            dimension_semantics=("parallel",)),
        cost_estimate=cost,
    )(x, folded["w_packed"], b)

    # Row-major flatten of (Bp, pack) restores the original batch order.
    return out.reshape(b_pad, 1)[:B]


def init_params(key, observation_space_size, action_space_size):
    """Deterministic init mimicking PyTorch's default Linear init
    (uniform(-1/sqrt(fan_in), 1/sqrt(fan_in)) for weight and bias).
    Weights stored as (in, out); biases as (1, out)."""
    dims = [
        observation_space_size,
        action_space_size * 2 ** 2,
        action_space_size * 2 ** 1,
        action_space_size,
        1,
    ]
    params = []
    for fan_in, fan_out in zip(dims[:-1], dims[1:]):
        key, kw, kb = jax.random.split(key, 3)
        bound = 1.0 / jnp.sqrt(jnp.float32(fan_in))
        w = jax.random.uniform(kw, (fan_in, fan_out), jnp.float32,
                               minval=-bound, maxval=bound)
        b = jax.random.uniform(kb, (1, fan_out), jnp.float32,
                               minval=-bound, maxval=bound)
        params.append((w, b))
    return params


def qvalue_forward_ref(state, params):
    """Pure-JAX reference of the original (unfolded) linear chain."""
    h = state.astype(jnp.float32)
    for w, b in params:
        h = h @ w + b
    return h


if __name__ == "__main__":
    observation_space_size = 32
    action_space_size = 8

    key = jax.random.PRNGKey(0)
    params = init_params(key, observation_space_size, action_space_size)
    folded = fold_params(params)

    # 1) Module-scale tiny batch -> plain-jnp fallback path.
    key, k1 = jax.random.split(key)
    state_small = jax.random.normal(k1, (8, observation_space_size), jnp.float32)
    out_small = jax.block_until_ready(qvalue_forward(state_small, folded))
    ref_small = qvalue_forward_ref(state_small, params)
    assert out_small.shape == (8, 1), out_small.shape
    assert jnp.allclose(out_small, ref_small, atol=1e-5, rtol=1e-5)

    # 2) Batch large enough to exercise the Pallas kernel (still small: 128 KiB).
    key, k2 = jax.random.split(key)
    state = jax.random.normal(k2, (1024, observation_space_size), jnp.float32)
    out = jax.block_until_ready(qvalue_forward(state, folded))
    ref = qvalue_forward_ref(state, params)
    assert out.shape == (1024, 1), out.shape
    assert jnp.allclose(out, ref, atol=1e-5, rtol=1e-5), "mismatch vs reference"

    # 3) Ragged bf16 batch (B not a multiple of the pack factor) -> exercises
    #    the in-kernel dtype cast and the pad/mask path.
    key, k3 = jax.random.split(key)
    state_r = jax.random.normal(
        k3, (2003, observation_space_size), jnp.float32).astype(jnp.bfloat16)
    out_r = jax.block_until_ready(qvalue_forward(state_r, folded))
    ref_r = qvalue_forward_ref(state_r, params)
    assert out_r.shape == (2003, 1), out_r.shape
    assert jnp.allclose(out_r, ref_r, atol=1e-4, rtol=1e-4), "bf16 mismatch"

    print("KERNEL_OK")
</pallas_src>

<mosaic_0001>
module attributes {stable_mosaic.version = 11 : i64} {
  func.func @_qvalue_kernel(%arg0: i32, %arg1: memref<256x128xf32, #tpu.memory_space<vmem>>, %arg2: memref<128x4xf32, #tpu.memory_space<vmem>>, %arg3: memref<1x1xf32, #tpu.memory_space<smem>>, %arg4: memref<256x4xf32, #tpu.memory_space<vmem>>) attributes {dimension_semantics = [#tpu.dimension_semantics<parallel>], iteration_bounds = array<i64: 1>, scalar_prefetch = 0 : i64, scratch_operands = 0 : i64, tpu.core_type = #tpu.core_type<tc>, window_params = [{transform_indices = @transform_0, window_bounds = array<i64: 256, 128>}, {pipeline_mode = #tpu.pipeline_mode<synchronous>, transform_indices = @transform_1, window_bounds = array<i64: 128, 4>}, {transform_indices = @transform_2, window_bounds = array<i64: 1, 1>}, {transform_indices = @transform_3, window_bounds = array<i64: 256, 4>}]} {
    %c0 = arith.constant 0 : index
    %c0_0 = arith.constant 0 : index
    %0 = vector.load %arg1[%c0, %c0_0] : memref<256x128xf32, #tpu.memory_space<vmem>>, vector<256x128xf32>
    %c0_1 = arith.constant 0 : index
    %c0_2 = arith.constant 0 : index
    %1 = vector.load %arg2[%c0_1, %c0_2] : memref<128x4xf32, #tpu.memory_space<vmem>>, vector<128x4xf32>
    %cst = arith.constant dense<0.000000e+00> : vector<256x4xf32>
    %2 = tpu.matmul %0, %1, %cst {dimension_numbers = #tpu.dot_dimension_numbers<[1], [0], [0], [1], [0, 0, 1, 1], [], []>} : vector<256x128xf32>, vector<128x4xf32>, vector<256x4xf32> -> vector<256x4xf32>
    %c0_3 = arith.constant 0 : index
    %c0_4 = arith.constant 0 : index
    %3 = memref.load %arg3[%c0_3, %c0_4] : memref<1x1xf32, #tpu.memory_space<smem>>
    %4 = vector.broadcast %3 : f32 to vector<256x4xf32>
    %5 = arith.addf %2, %4 : vector<256x4xf32>
    %c0_5 = arith.constant 0 : index
    %c0_6 = arith.constant 0 : index
    %6 = vector.load %arg4[%c0_5, %c0_6] : memref<256x4xf32, #tpu.memory_space<vmem>>, vector<256x4xf32>
    tpu.vector_store %arg4[%c0_5, %c0_6], %5 {strides = array<i32>} : memref<256x4xf32, #tpu.memory_space<vmem>>, vector<256x4xf32>,
    return
  }
  func.func @transform_0(%arg0: i32) -> (i32, i32) {
    %c0_i32 = arith.constant 0 : i32
    %c0_i32_0 = arith.constant 0 : i32
    return %arg0, %c0_i32 : i32, i32
  }
  func.func @transform_1(%arg0: i32) -> (i32, i32) {
    %c0_i32 = arith.constant 0 : i32
    %c0_i32_0 = arith.constant 0 : i32
    %c0_i32_1 = arith.constant 0 : i32
    return %c0_i32, %c0_i32_0 : i32, i32
  }
  func.func @transform_2(%arg0: i32) -> (i32, i32) {
    %c0_i32 = arith.constant 0 : i32
    %c0_i32_0 = arith.constant 0 : i32
    %c0_i32_1 = arith.constant 0 : i32
    return %c0_i32, %c0_i32_0 : i32, i32
  }
  func.func @transform_3(%arg0: i32) -> (i32, i32) {
    %c0_i32 = arith.constant 0 : i32
    %c0_i32_0 = arith.constant 0 : i32
    return %arg0, %c0_i32 : i32, i32
  }
}

</mosaic_0001>

<llo_original>
// kernel: tpu_custom_call.1
$region0: #{tpu_custom_call.1}
  #allocation0 [shape = 'u32[]', space=smem, size = 0x4, offset = 0x4, fixed_abs, tag = 'smem constant byte address 0x4 - core index']
  #allocation1 [shape = 'u32[72,128]{1,0:T(1,128)}', space=vmem, size = 0x9000, scoped, tag = 'internal scratch']
  #allocation2 [shape = 'f32[1,1]{1,0:T(1,128)S(6)}', space=smem, size = 0x200, scoped, tag = 'scoped memory for tpu_custom_call.1']
  %s0 = inlined_call_operand.hbm [shape: f32[256,128], index: 0, kind: input, shape index: {}]
  %s1 = inlined_call_operand.vmem [shape: f32[128,4], index: 1, kind: input, shape index: {}]
  %s2 = inlined_call_operand.<no memory space> [shape: f32[1,1], index: 2, kind: input, shape index: {}]
  %s3 = inlined_call_operand.vmem [shape: f32[256,4], index: 3, kind: output, shape index: {}]
  %s4 = sld [smem:[#allocation0]]
  $region26: #{tpu_custom_call.1} parent=0
    _
  %s6 = ssub.s32 1, %s4
  %s7 = scalar_select 0, %s6, %s4
  %8 = sst [smem:[#allocation2]] %s2
  $region1: #{tpu_custom_call.1} parent=0
    #allocation3 [shape = 'u8[131072]{0}', space=vmem, size = 0x20000, scoped, tag = 'input window, operand 0, single buffered']
    #allocation4 [shape = 's32[1]{0}', space=sflag, size = 0x4, scoped, tag = 'scoped memory for tpu_custom_call.1']
    %9 = vsyncpa [#allocation4], 0
    // Predicated region
    $region2: #{tpu_custom_call.1} parent=1 // pred_check
      _
    $region3: #{tpu_custom_call.1} parent=1 // pred_check_branch
      %11 = sbr.rel (0) target = $region5
    $region4: #{tpu_custom_call.1} parent=1 // pred_region
      %13 = vsyncadd [#allocation4], 0
      %s14 = sshll.u32 %s0, 4
      %s15 = int_to_ptr.hbm [resolvable:$true] %s14
      %s16 = sshll.u32 [#allocation3], 4
      %s17 = int_to_ptr.vmem [resolvable:$true] %s16
      %22 = dma.hbm_to_vmem [thread:$0]  %s15, 4096, %s17, [#allocation4], 128, 128, 8
    $region5: #{tpu_custom_call.1} parent=1 // pred_fallthru
      _
    // Predicated region
    $region6: #{tpu_custom_call.1} parent=1 // pred_check
      _
    $region7: #{tpu_custom_call.1} parent=1 // pred_check_branch
      %24 = sbr.rel (0) target = $region9
    $region8: #{tpu_custom_call.1} parent=1 // pred_region
      _
    $region9: #{tpu_custom_call.1} parent=1 // pred_fallthru
      _
    // Predicated region
    $region10: #{tpu_custom_call.1} parent=1 // pred_check
      _
    $region11: #{tpu_custom_call.1} parent=1 // pred_check_branch
      %26 = sbr.rel (0) target = $region13
    $region12: #{tpu_custom_call.1} parent=1 // pred_region
      _
    $region13: #{tpu_custom_call.1} parent=1 // pred_fallthru
      _
    // Predicated region
    $region14: #{tpu_custom_call.1} parent=1 // pred_check
      _
    $region15: #{tpu_custom_call.1} parent=1 // pred_check_branch
      %28 = sbr.rel (0) target = $region17
    $region16: #{tpu_custom_call.1} parent=1 // pred_region
      %30 = dma.done [#allocation4], 4096
    $region17: #{tpu_custom_call.1} parent=1 // pred_fallthru
      _
    %v31 = vld [vmem:[#allocation3] sm:$0xff]
    %v32 = vld [vmem:[#allocation3 + $0x8] sm:$0xff]
    %v33 = vld [vmem:[#allocation3 + $0x10] sm:$0xff]
    %v34 = vld [vmem:[#allocation3 + $0x18] sm:$0xff]
    %v35 = vld [vmem:[#allocation3 + $0x20] sm:$0xff]
    %v36 = vld [vmem:[#allocation3 + $0x28] sm:$0xff]
    %v37 = vld [vmem:[#allocation3 + $0x30] sm:$0xff]
    %v38 = vld [vmem:[#allocation3 + $0x38] sm:$0xff]
    %v39 = vld [vmem:[#allocation3 + $0x40] sm:$0xff]
    %v40 = vld [vmem:[#allocation3 + $0x48] sm:$0xff]
    %v41 = vld [vmem:[#allocation3 + $0x50] sm:$0xff]
    %v42 = vld [vmem:[#allocation3 + $0x58] sm:$0xff]
    %v43 = vld [vmem:[#allocation3 + $0x60] sm:$0xff]
    %v44 = vld [vmem:[#allocation3 + $0x68] sm:$0xff]
    %v45 = vld [vmem:[#allocation3 + $0x70] sm:$0xff]
    %v46 = vld [vmem:[#allocation3 + $0x78] sm:$0xff]
    %v47 = vld [vmem:[#allocation3 + $0x80] sm:$0xff]
    %v48 = vld [vmem:[#allocation3 + $0x88] sm:$0xff]
    %v49 = vld [vmem:[#allocation3 + $0x90] sm:$0xff]
    %v50 = vld [vmem:[#allocation3 + $0x98] sm:$0xff]
    %v51 = vld [vmem:[#allocation3 + $0xa0] sm:$0xff]
    %v52 = vld [vmem:[#allocation3 + $0xa8] sm:$0xff]
    %v53 = vld [vmem:[#allocation3 + $0xb0] sm:$0xff]
    %v54 = vld [vmem:[#allocation3 + $0xb8] sm:$0xff]
    %v55 = vld [vmem:[#allocation3 + $0xc0] sm:$0xff]
    %v56 = vld [vmem:[#allocation3 + $0xc8] sm:$0xff]
    %v57 = vld [vmem:[#allocation3 + $0xd0] sm:$0xff]
    %v58 = vld [vmem:[#allocation3 + $0xd8] sm:$0xff]
    %v59 = vld [vmem:[#allocation3 + $0xe0] sm:$0xff]
    %v60 = vld [vmem:[#allocation3 + $0xe8] sm:$0xff]
    %v61 = vld [vmem:[#allocation3 + $0xf0] sm:$0xff]
    %v62 = vld [vmem:[#allocation3 + $0xf8] sm:$0xff]
    %v63 = vld [vmem:[%s1] sm:$0xff]
    %v64 = vld [vmem:[%s1 + $0x8] sm:$0xff]
    %v65 = vld [vmem:[%s1 + $0x10] sm:$0xff]
    %v66 = vld [vmem:[%s1 + $0x18] sm:$0xff]
    %v67 = vld [vmem:[%s1 + $0x20] sm:$0xff]
    %v68 = vld [vmem:[%s1 + $0x28] sm:$0xff]
    %v69 = vld [vmem:[%s1 + $0x30] sm:$0xff]
    %v70 = vld [vmem:[%s1 + $0x38] sm:$0xff]
    %v71 = vld [vmem:[%s1 + $0x40] sm:$0xff]
    %v72 = vld [vmem:[%s1 + $0x48] sm:$0xff]
    %v73 = vld [vmem:[%s1 + $0x50] sm:$0xff]
    %v74 = vld [vmem:[%s1 + $0x58] sm:$0xff]
    %v75 = vld [vmem:[%s1 + $0x60] sm:$0xff]
    %v76 = vld [vmem:[%s1 + $0x68] sm:$0xff]
    %v77 = vld [vmem:[%s1 + $0x70] sm:$0xff]
    %v78 = vld [vmem:[%s1 + $0x78] sm:$0xff]
    %s79 = sld [smem:[#allocation2]]
    %v80 = vstv %s79
    %81 = vmatpush.msra.mxu0 %v78
    %82 = vmatpush.msra.mxu0 %v77
    %83 = vmatpush.msra.mxu0 %v76
    %84 = vmatpush.msra.mxu0 %v75
    %85 = vmatpush.msra.mxu0 %v74
    %86 = vmatpush.msra.mxu0 %v73
    %87 = vmatpush.msra.mxu0 %v72
    %88 = vmatpush.msra.mxu0 %v71
    %89 = vmatpush.msra.mxu0 %v70
    %90 = vmatpush.msra.mxu0 %v69
    %91 = vmatpush.msra.mxu0 %v68
    %92 = vmatpush.msra.mxu0 %v67
    %93 = vmatpush.msra.mxu0 %v66
    %94 = vmatpush.msra.mxu0 %v65
    %95 = vmatpush.msra.mxu0 %v64
    %96 = vmatpush.msra.mxu0 %v63
    %97 = vmatmul.f32.gmra.mxu0 %v31
    %v98 = vpop.f32.mrf.mxu0
    %v99 = vadd.f32 %v80, %v98
    %100 = vmatmul.f32.gmra.mxu0 %v32
    %v101 = vpop.f32.mrf.mxu0
    %v102 = vadd.f32 %v80, %v101
    %103 = vmatmul.f32.gmra.mxu0 %v33
    %v104 = vpop.f32.mrf.mxu0
    %v105 = vadd.f32 %v80, %v104
    %106 = vmatmul.f32.gmra.mxu0 %v34
    %v107 = vpop.f32.mrf.mxu0
    %v108 = vadd.f32 %v80, %v107
    %109 = vmatmul.f32.gmra.mxu0 %v35
    %v110 = vpop.f32.mrf.mxu0
    %v111 = vadd.f32 %v80, %v110
    %112 = vmatmul.f32.gmra.mxu0 %v36
    %v113 = vpop.f32.mrf.mxu0
    %v114 = vadd.f32 %v80, %v113
    %115 = vmatmul.f32.gmra.mxu0 %v37
    %v116 = vpop.f32.mrf.mxu0
    %v117 = vadd.f32 %v80, %v116
    %118 = vmatmul.f32.gmra.mxu0 %v38
    %v119 = vpop.f32.mrf.mxu0
    %v120 = vadd.f32 %v80, %v119
    %121 = vmatmul.f32.gmra.mxu0 %v39
    %v122 = vpop.f32.mrf.mxu0
    %v123 = vadd.f32 %v80, %v122
    %124 = vmatmul.f32.gmra.mxu0 %v40
    %v125 = vpop.f32.mrf.mxu0
    %v126 = vadd.f32 %v80, %v125
    %127 = vmatmul.f32.gmra.mxu0 %v41
    %v128 = vpop.f32.mrf.mxu0
    %v129 = vadd.f32 %v80, %v128
    %130 = vmatmul.f32.gmra.mxu0 %v42
    %v131 = vpop.f32.mrf.mxu0
    %v132 = vadd.f32 %v80, %v131
    %133 = vmatmul.f32.gmra.mxu0 %v43
    %v134 = vpop.f32.mrf.mxu0
    %v135 = vadd.f32 %v80, %v134
    %136 = vmatmul.f32.gmra.mxu0 %v44
    %v137 = vpop.f32.mrf.mxu0
    %v138 = vadd.f32 %v80, %v137
    %139 = vmatmul.f32.gmra.mxu0 %v45
    %v140 = vpop.f32.mrf.mxu0
    %v141 = vadd.f32 %v80, %v140
    %142 = vmatmul.f32.gmra.mxu0 %v46
    %v143 = vpop.f32.mrf.mxu0
    %v144 = vadd.f32 %v80, %v143
    %145 = vmatmul.f32.gmra.mxu0 %v47
    %v146 = vpop.f32.mrf.mxu0
    %v147 = vadd.f32 %v80, %v146
    %148 = vmatmul.f32.gmra.mxu0 %v48
    %v149 = vpop.f32.mrf.mxu0
    %v150 = vadd.f32 %v80, %v149
    %151 = vmatmul.f32.gmra.mxu0 %v49
    %v152 = vpop.f32.mrf.mxu0
    %v153 = vadd.f32 %v80, %v152
    %154 = vmatmul.f32.gmra.mxu0 %v50
    %v155 = vpop.f32.mrf.mxu0
    %v156 = vadd.f32 %v80, %v155
    %157 = vmatmul.f32.gmra.mxu0 %v51
    %v158 = vpop.f32.mrf.mxu0
    %v159 = vadd.f32 %v80, %v158
    %160 = vmatmul.f32.gmra.mxu0 %v52
    %v161 = vpop.f32.mrf.mxu0
    %v162 = vadd.f32 %v80, %v161
    %163 = vmatmul.f32.gmra.mxu0 %v53
    %v164 = vpop.f32.mrf.mxu0
    %v165 = vadd.f32 %v80, %v164
    %166 = vmatmul.f32.gmra.mxu0 %v54
    %v167 = vpop.f32.mrf.mxu0
    %v168 = vadd.f32 %v80, %v167
    %169 = vmatmul.f32.gmra.mxu0 %v55
    %v170 = vpop.f32.mrf.mxu0
    %v171 = vadd.f32 %v80, %v170
    %172 = vmatmul.f32.gmra.mxu0 %v56
    %v173 = vpop.f32.mrf.mxu0
    %v174 = vadd.f32 %v80, %v173
    %175 = vmatmul.f32.gmra.mxu0 %v57
    %v176 = vpop.f32.mrf.mxu0
    %v177 = vadd.f32 %v80, %v176
    %178 = vmatmul.f32.gmra.mxu0 %v58
    %v179 = vpop.f32.mrf.mxu0
    %v180 = vadd.f32 %v80, %v179
    %181 = vmatmul.f32.gmra.mxu0 %v59
    %v182 = vpop.f32.mrf.mxu0
    %v183 = vadd.f32 %v80, %v182
    %184 = vmatmul.f32.gmra.mxu0 %v60
    %v185 = vpop.f32.mrf.mxu0
    %v186 = vadd.f32 %v80, %v185
    %187 = vmatmul.f32.gmra.mxu0 %v61
    %v188 = vpop.f32.mrf.mxu0
    %v189 = vadd.f32 %v80, %v188
    %190 = vmatmul.f32.gmra.mxu0 %v62
    %v191 = vpop.f32.mrf.mxu0
    %v192 = vadd.f32 %v80, %v191
    %193 = vdwg.mxu0
    %vm194 = vcmask 31744
    %195 = vst.msk [vmem:[%s3] sm:$0xff] %vm194, %v99
    %196 = vst.msk [vmem:[%s3 + $0x8] sm:$0xff] %vm194, %v102
    %197 = vst.msk [vmem:[%s3 + $0x10] sm:$0xff] %vm194, %v105
    %198 = vst.msk [vmem:[%s3 + $0x18] sm:$0xff] %vm194, %v108
    %199 = vst.msk [vmem:[%s3 + $0x20] sm:$0xff] %vm194, %v111
    %200 = vst.msk [vmem:[%s3 + $0x28] sm:$0xff] %vm194, %v114
    %201 = vst.msk [vmem:[%s3 + $0x30] sm:$0xff] %vm194, %v117
    %202 = vst.msk [vmem:[%s3 + $0x38] sm:$0xff] %vm194, %v120
    %203 = vst.msk [vmem:[%s3 + $0x40] sm:$0xff] %vm194, %v123
    %204 = vst.msk [vmem:[%s3 + $0x48] sm:$0xff] %vm194, %v126
    %205 = vst.msk [vmem:[%s3 + $0x50] sm:$0xff] %vm194, %v129
    %206 = vst.msk [vmem:[%s3 + $0x58] sm:$0xff] %vm194, %v132
    %207 = vst.msk [vmem:[%s3 + $0x60] sm:$0xff] %vm194, %v135
    %208 = vst.msk [vmem:[%s3 + $0x68] sm:$0xff] %vm194, %v138
    %209 = vst.msk [vmem:[%s3 + $0x70] sm:$0xff] %vm194, %v141
    %210 = vst.msk [vmem:[%s3 + $0x78] sm:$0xff] %vm194, %v144
    %211 = vst.msk [vmem:[%s3 + $0x80] sm:$0xff] %vm194, %v147
    %212 = vst.msk [vmem:[%s3 + $0x88] sm:$0xff] %vm194, %v150
    %213 = vst.msk [vmem:[%s3 + $0x90] sm:$0xff] %vm194, %v153
    %214 = vst.msk [vmem:[%s3 + $0x98] sm:$0xff] %vm194, %v156
    %215 = vst.msk [vmem:[%s3 + $0xa0] sm:$0xff] %vm194, %v159
    %216 = vst.msk [vmem:[%s3 + $0xa8] sm:$0xff] %vm194, %v162
    %217 = vst.msk [vmem:[%s3 + $0xb0] sm:$0xff] %vm194, %v165
    %218 = vst.msk [vmem:[%s3 + $0xb8] sm:$0xff] %vm194, %v168
    %219 = vst.msk [vmem:[%s3 + $0xc0] sm:$0xff] %vm194, %v171
    %220 = vst.msk [vmem:[%s3 + $0xc8] sm:$0xff] %vm194, %v174
    %221 = vst.msk [vmem:[%s3 + $0xd0] sm:$0xff] %vm194, %v177
    %222 = vst.msk [vmem:[%s3 + $0xd8] sm:$0xff] %vm194, %v180
    %223 = vst.msk [vmem:[%s3 + $0xe0] sm:$0xff] %vm194, %v183
    %224 = vst.msk [vmem:[%s3 + $0xe8] sm:$0xff] %vm194, %v186
    %225 = vst.msk [vmem:[%s3 + $0xf0] sm:$0xff] %vm194, %v189
    %226 = vst.msk [vmem:[%s3 + $0xf8] sm:$0xff] %vm194, %v192
    // Predicated region
    $region18: #{tpu_custom_call.1} parent=1 // pred_check
      _
    $region19: #{tpu_custom_call.1} parent=1 // pred_check_branch
      %228 = sbr.rel (0) target = $region21
    $region20: #{tpu_custom_call.1} parent=1 // pred_region
      _
    $region21: #{tpu_custom_call.1} parent=1 // pred_fallthru
      _
    // Predicated region
    $region22: #{tpu_custom_call.1} parent=1 // pred_check
      _
    $region23: #{tpu_custom_call.1} parent=1 // pred_check_branch
      %230 = sbr.rel (0) target = $region25
    $region24: #{tpu_custom_call.1} parent=1 // pred_region
      _
    $region25: #{tpu_custom_call.1} parent=1 // pred_fallthru
      _
    %231 = vsyncpa [#allocation4], 1

</llo_original>
